<compile_context>
chip_gen: v6e
topology: v6e:2x2x1
jax: 0.10.0
libtpu: 0.0.40
codegen_flags: <defaults>
</compile_context>

<pallas_src>
import functools

import jax
import jax.numpy as jnp
from jax.experimental import pallas as pl
from jax.experimental.pallas import tpu as pltpu


def _round_up(x, m):
    return ((x + m - 1) // m) * m


def bert_output_kernel(x_ref, w_ref, b_ref, res_ref, gamma_ref, beta_ref,
                       o_ref, *, eps):
    # x_ref:     (tm, I)   hidden_states tile (native dtype, e.g. bf16)
    # w_ref:     (I, H)    dense weight, pre-transposed to [in, out] (resident)
    # b_ref:     (1, H)    dense bias
    # res_ref:   (tm, H)   residual (input_tensor) tile
    # gamma_ref: (1, H)    LayerNorm weight
    # beta_ref:  (1, H)    LayerNorm bias
    # o_ref:     (tm, H)   output tile

    # Dense: MXU matmul in the operands' native dtype, f32 accumulation.
    y = jnp.dot(x_ref[...], w_ref[...], preferred_element_type=jnp.float32)

    # Dropout: identity at inference time.
    # TODO(synk): training-mode dropout (pltpu.prng_random_bits mask) not implemented.

    # Fold the bias into the residual add: y = dot + (res + b).
    y = y + (res_ref[...].astype(jnp.float32) + b_ref[...].astype(jnp.float32))

    # Two-pass LayerNorm over the hidden axis (numerically robust; no (tm, H)
    # scale/shift temporaries, broadcasts stay unexpanded).
    h_dim = y.shape[-1]
    inv_h = 1.0 / h_dim
    mean = jnp.sum(y, axis=-1, keepdims=True) * inv_h          # (tm, 1)
    d = y - mean                                               # (tm, H)
    var = jnp.sum(d * d, axis=-1, keepdims=True) * inv_h       # (tm, 1)
    inv = jax.lax.rsqrt(var + eps)                             # (tm, 1)

    o_ref[...] = ((d * inv) * gamma_ref[...].astype(jnp.float32)
                  + beta_ref[...].astype(jnp.float32)).astype(o_ref.dtype)


def bert_output(hidden_states, input_tensor, w, b, gamma, beta,
                *, eps=1e-12, tm=512):
    """BertOutput forward (eval-mode dropout).

    hidden_states: (B, S, I), input_tensor: (B, S, H), w: (I, H) (pre-transposed
    nn.Linear weight), b/gamma/beta: (H,). Returns (B, S, H) in hidden_states.dtype.

    For best MXU throughput (critical on v5e: bf16-only MXU peak, lowest HBM BW)
    pass bf16 hidden_states / input_tensor / w; accumulation and the LayerNorm
    epilogue are always f32.
    """
    B, S, I = hidden_states.shape
    H = input_tensor.shape[-1]
    M = B * S
    out_dtype = hidden_states.dtype

    xb = jnp.dtype(hidden_states.dtype).itemsize
    wb = jnp.dtype(w.dtype).itemsize
    rb = jnp.dtype(input_tensor.dtype).itemsize
    ob = jnp.dtype(out_dtype).itemsize

    # Dtype-aware minimum token-tile granularity (sublane packing):
    # f32 -> 8, bf16 -> 16, int8/fp8 -> 32.
    min_sub = max(8, 32 // max(xb, 1))

    # Effective token tile: large for MXU utilization, shrunk for tiny inputs.
    tm_eff = min(_round_up(tm, min_sub), _round_up(M, min_sub))

    # Generation-aware VMEM budget: physical capacity minus headroom for
    # compiler-internal scratch (never below the 32 MiB scoped default).
    try:
        vmem_cap = int(pltpu.get_tpu_info().vmem_capacity_bytes)
    except Exception:
        vmem_cap = 64 * 1024 * 1024  # conservative (v7x per-TC) fallback
    vmem_ceiling = max(32 * 1024 * 1024, vmem_cap - 16 * 1024 * 1024)

    def _vmem_needed(t):
        return (2 * t * I * xb        # double-buffered hidden_states tiles
                + 1 * I * H * wb      # single-buffered resident weight
                + 2 * t * H * rb      # double-buffered residual tiles
                + 2 * t * H * ob      # double-buffered output tiles
                + 2 * t * H * 4       # f32 epilogue temporaries (y, d)
                + 6 * H * 4           # bias / gamma / beta vectors
                + (4 << 20))          # slack for compiler-internal scratch

    while tm_eff > min_sub and _vmem_needed(tm_eff) > vmem_ceiling:
        tm_eff = max(min_sub, _round_up(tm_eff // 2, min_sub))

    vmem_limit = int(min(max(_vmem_needed(tm_eff), 32 * 1024 * 1024),
                         vmem_ceiling))

    # Ragged last block handled by Pallas; no host-side padding/slicing.
    # (On v7x, a tile count >= 2 lets the single "parallel" axis shard across
    # both TensorCores; each TC holds its own resident weight copy.)
    grid_m = (M + tm_eff - 1) // tm_eff

    x2 = hidden_states.reshape(M, I)
    r2 = input_tensor.reshape(M, H)
    b2 = b.reshape(1, H)
    g2 = gamma.reshape(1, H)
    be2 = beta.reshape(1, H)

    cost = pl.CostEstimate(
        flops=2 * M * I * H,
        transcendentals=0,
        bytes_accessed=(M * I * xb + I * H * wb + M * H * rb
                        + M * H * ob + 3 * H * 4),
    )

    kernel = functools.partial(bert_output_kernel, eps=eps)

    out2 = pl.pallas_call(
        kernel,
        out_shape=jax.ShapeDtypeStruct((M, H), out_dtype),
        grid_spec=pltpu.PrefetchScalarGridSpec(
            num_scalar_prefetch=0,
            grid=(grid_m,),
            in_specs=[
                # hidden_states tile (streamed, default double-buffering)
                pl.BlockSpec((tm_eff, I), lambda i: (i, 0)),
                # dense weight: constant index -> single-buffered, VMEM-resident
                pl.BlockSpec((I, H), lambda i: (0, 0),
                             pipeline_mode=pl.Buffered(1)),
                # dense bias
                pl.BlockSpec((1, H), lambda i: (0, 0),
                             pipeline_mode=pl.Buffered(1)),
                # residual tile (streamed)
                pl.BlockSpec((tm_eff, H), lambda i: (i, 0)),
                # LayerNorm gamma
                pl.BlockSpec((1, H), lambda i: (0, 0),
                             pipeline_mode=pl.Buffered(1)),
                # LayerNorm beta
                pl.BlockSpec((1, H), lambda i: (0, 0),
                             pipeline_mode=pl.Buffered(1)),
            ],
            out_specs=pl.BlockSpec((tm_eff, H), lambda i: (i, 0)),
        ),
        compiler_params=pltpu.CompilerParams(
            dimension_semantics=("parallel",),
            vmem_limit_bytes=vmem_limit,
        ),
        cost_estimate=cost,
    )(x2, w, b2, r2, g2, be2)

    return out2.reshape(B, S, H)


def _reference(hidden_states, input_tensor, w, b, gamma, beta, eps):
    """Plain-JAX f32 reference (BertOutput in eval mode)."""
    B, S, I = hidden_states.shape
    H = input_tensor.shape[-1]
    x = hidden_states.reshape(-1, I).astype(jnp.float32)
    r = input_tensor.reshape(-1, H).astype(jnp.float32)
    h = x @ w.astype(jnp.float32) + b.astype(jnp.float32)
    y = h + r
    mu = y.mean(-1, keepdims=True)
    var = ((y - mu) ** 2).mean(-1, keepdims=True)
    out = ((y - mu) / jnp.sqrt(var + eps)) * gamma.astype(jnp.float32) \
        + beta.astype(jnp.float32)
    return out.reshape(B, S, H)


if __name__ == "__main__":
    # Small BERT-like config
    batch, seq = 2, 8
    hidden_size = 32
    intermediate_size = 128
    layer_norm_eps = 1e-12

    key = jax.random.PRNGKey(0)
    k1, k2, k3, k4 = jax.random.split(key, 4)

    hidden_states = jax.random.normal(
        k1, (batch, seq, intermediate_size), dtype=jnp.float32)
    input_tensor = jax.random.normal(
        k2, (batch, seq, hidden_size), dtype=jnp.float32)

    # nn.Linear weight is (out, in); stored pre-transposed (in, out).
    w = jax.random.normal(
        k3, (intermediate_size, hidden_size), dtype=jnp.float32) * 0.02
    b = jax.random.normal(k4, (hidden_size,), dtype=jnp.float32) * 0.02
    gamma = jnp.ones((hidden_size,), dtype=jnp.float32)
    beta = jnp.zeros((hidden_size,), dtype=jnp.float32)

    # --- f32 path (exactness check) ---
    out_f32 = bert_output(hidden_states, input_tensor, w, b, gamma, beta,
                          eps=layer_norm_eps)
    jax.block_until_ready(out_f32)
    ref = _reference(hidden_states, input_tensor, w, b, gamma, beta,
                     layer_norm_eps)
    assert jnp.allclose(out_f32, ref, atol=1e-4, rtol=1e-4), "f32 mismatch"

    # --- bf16 path (fast MXU path; looser tolerance) ---
    hs_bf16 = hidden_states.astype(jnp.bfloat16)
    it_bf16 = input_tensor.astype(jnp.bfloat16)
    w_bf16 = w.astype(jnp.bfloat16)
    out_bf16 = bert_output(hs_bf16, it_bf16, w_bf16, b, gamma, beta,
                           eps=layer_norm_eps)
    jax.block_until_ready(out_bf16)
    ref_bf16 = _reference(hs_bf16, it_bf16, w_bf16, b, gamma, beta,
                          layer_norm_eps)
    assert jnp.allclose(out_bf16.astype(jnp.float32), ref_bf16,
                        atol=5e-2, rtol=5e-2), "bf16 mismatch"

    # --- ragged-edge path (grid doesn't divide the token count) ---
    k5, k6 = jax.random.split(k1)
    hs_r = jax.random.normal(k5, (2, 12, intermediate_size), dtype=jnp.float32)
    it_r = jax.random.normal(k6, (2, 12, hidden_size), dtype=jnp.float32)
    out_r = bert_output(hs_r, it_r, w, b, gamma, beta,
                        eps=layer_norm_eps, tm=16)   # M=24, tile=16 -> ragged tail
    jax.block_until_ready(out_r)
    ref_r = _reference(hs_r, it_r, w, b, gamma, beta, layer_norm_eps)
    assert jnp.allclose(out_r, ref_r, atol=1e-4, rtol=1e-4), "ragged mismatch"

    print("KERNEL_OK")
</pallas_src>

<mosaic_0001>
module attributes {stable_mosaic.version = 11 : i64} {
  func.func @bert_output_kernel(%arg0: i32, %arg1: memref<16x128xf32, #tpu.memory_space<vmem>>, %arg2: memref<128x32xf32, #tpu.memory_space<vmem>>, %arg3: memref<1x32xf32, #tpu.memory_space<vmem>>, %arg4: memref<16x32xf32, #tpu.memory_space<vmem>>, %arg5: memref<1x32xf32, #tpu.memory_space<vmem>>, %arg6: memref<1x32xf32, #tpu.memory_space<vmem>>, %arg7: memref<16x32xf32, #tpu.memory_space<vmem>>) attributes {dimension_semantics = [#tpu.dimension_semantics<parallel>], iteration_bounds = array<i64: 1>, scalar_prefetch = 0 : i64, scratch_operands = 0 : i64, tpu.core_type = #tpu.core_type<tc>, window_params = [{transform_indices = @transform_0, window_bounds = array<i64: 16, 128>}, {pipeline_mode = #tpu.pipeline_mode<synchronous>, transform_indices = @transform_1, window_bounds = array<i64: 128, 32>}, {pipeline_mode = #tpu.pipeline_mode<synchronous>, transform_indices = @transform_2, window_bounds = array<i64: 1, 32>}, {transform_indices = @transform_3, window_bounds = array<i64: 16, 32>}, {pipeline_mode = #tpu.pipeline_mode<synchronous>, transform_indices = @transform_4, window_bounds = array<i64: 1, 32>}, {pipeline_mode = #tpu.pipeline_mode<synchronous>, transform_indices = @transform_5, window_bounds = array<i64: 1, 32>}, {transform_indices = @transform_6, window_bounds = array<i64: 16, 32>}]} {
    %c0 = arith.constant 0 : index
    %c0_0 = arith.constant 0 : index
    %0 = vector.load %arg1[%c0, %c0_0] : memref<16x128xf32, #tpu.memory_space<vmem>>, vector<16x128xf32>
    %c0_1 = arith.constant 0 : index
    %c0_2 = arith.constant 0 : index
    %1 = vector.load %arg2[%c0_1, %c0_2] : memref<128x32xf32, #tpu.memory_space<vmem>>, vector<128x32xf32>
    %cst = arith.constant dense<0.000000e+00> : vector<16x32xf32>
    %2 = tpu.matmul %0, %1, %cst {dimension_numbers = #tpu.dot_dimension_numbers<[1], [0], [0], [1], [0, 0, 1, 1], [], []>} : vector<16x128xf32>, vector<128x32xf32>, vector<16x32xf32> -> vector<16x32xf32>
    %c0_3 = arith.constant 0 : index
    %c0_4 = arith.constant 0 : index
    %3 = vector.load %arg4[%c0_3, %c0_4] : memref<16x32xf32, #tpu.memory_space<vmem>>, vector<16x32xf32>
    %c0_5 = arith.constant 0 : index
    %c0_6 = arith.constant 0 : index
    %4 = vector.load %arg3[%c0_5, %c0_6] : memref<1x32xf32, #tpu.memory_space<vmem>>, vector<1x32xf32>
    %5 = vector.broadcast %4 : vector<1x32xf32> to vector<16x32xf32>
    %6 = arith.addf %3, %5 : vector<16x32xf32>
    %7 = arith.addf %2, %6 : vector<16x32xf32>
    %cst_7 = arith.constant dense<0.000000e+00> : vector<16xf32>
    %8 = vector.multi_reduction <add>, %7, %cst_7 [1] : vector<16x32xf32> to vector<16xf32>
    %9 = vector.shape_cast %8 : vector<16xf32> to vector<16x1xf32>
    %cst_8 = arith.constant 3.125000e-02 : f32
    %10 = vector.broadcast %cst_8 : f32 to vector<16x1xf32>
    %11 = arith.mulf %9, %10 : vector<16x1xf32>
    %12 = vector.broadcast %11 : vector<16x1xf32> to vector<16x32xf32>
    %13 = arith.subf %7, %12 : vector<16x32xf32>
    %14 = arith.mulf %13, %13 : vector<16x32xf32>
    %cst_9 = arith.constant dense<0.000000e+00> : vector<16xf32>
    %15 = vector.multi_reduction <add>, %14, %cst_9 [1] : vector<16x32xf32> to vector<16xf32>
    %16 = vector.shape_cast %15 : vector<16xf32> to vector<16x1xf32>
    %cst_10 = arith.constant 3.125000e-02 : f32
    %17 = vector.broadcast %cst_10 : f32 to vector<16x1xf32>
    %18 = arith.mulf %16, %17 : vector<16x1xf32>
    %cst_11 = arith.constant 9.99999996E-13 : f32
    %19 = vector.broadcast %cst_11 : f32 to vector<16x1xf32>
    %20 = arith.addf %18, %19 : vector<16x1xf32>
    %21 = math.rsqrt %20 : vector<16x1xf32>
    %22 = vector.broadcast %21 : vector<16x1xf32> to vector<16x32xf32>
    %23 = arith.mulf %13, %22 : vector<16x32xf32>
    %c0_12 = arith.constant 0 : index
    %c0_13 = arith.constant 0 : index
    %24 = vector.load %arg5[%c0_12, %c0_13] : memref<1x32xf32, #tpu.memory_space<vmem>>, vector<1x32xf32>
    %25 = vector.broadcast %24 : vector<1x32xf32> to vector<16x32xf32>
    %26 = arith.mulf %23, %25 : vector<16x32xf32>
    %c0_14 = arith.constant 0 : index
    %c0_15 = arith.constant 0 : index
    %27 = vector.load %arg6[%c0_14, %c0_15] : memref<1x32xf32, #tpu.memory_space<vmem>>, vector<1x32xf32>
    %28 = vector.broadcast %27 : vector<1x32xf32> to vector<16x32xf32>
    %29 = arith.addf %26, %28 : vector<16x32xf32>
    %c0_16 = arith.constant 0 : index
    %c0_17 = arith.constant 0 : index
    %30 = vector.load %arg7[%c0_16, %c0_17] : memref<16x32xf32, #tpu.memory_space<vmem>>, vector<16x32xf32>
    tpu.vector_store %arg7[%c0_16, %c0_17], %29 {strides = array<i32>} : memref<16x32xf32, #tpu.memory_space<vmem>>, vector<16x32xf32>,
    return
  }
  func.func @transform_0(%arg0: i32) -> (i32, i32) {
    %c0_i32 = arith.constant 0 : i32
    %c0_i32_0 = arith.constant 0 : i32
    return %arg0, %c0_i32 : i32, i32
  }
  func.func @transform_1(%arg0: i32) -> (i32, i32) {
    %c0_i32 = arith.constant 0 : i32
    %c0_i32_0 = arith.constant 0 : i32
    %c0_i32_1 = arith.constant 0 : i32
    return %c0_i32, %c0_i32_0 : i32, i32
  }
  func.func @transform_2(%arg0: i32) -> (i32, i32) {
    %c0_i32 = arith.constant 0 : i32
    %c0_i32_0 = arith.constant 0 : i32
    %c0_i32_1 = arith.constant 0 : i32
    return %c0_i32, %c0_i32_0 : i32, i32
  }
  func.func @transform_3(%arg0: i32) -> (i32, i32) {
    %c0_i32 = arith.constant 0 : i32
    %c0_i32_0 = arith.constant 0 : i32
    return %arg0, %c0_i32 : i32, i32
  }
  func.func @transform_4(%arg0: i32) -> (i32, i32) {
    %c0_i32 = arith.constant 0 : i32
    %c0_i32_0 = arith.constant 0 : i32
    %c0_i32_1 = arith.constant 0 : i32
    return %c0_i32, %c0_i32_0 : i32, i32
  }
  func.func @transform_5(%arg0: i32) -> (i32, i32) {
    %c0_i32 = arith.constant 0 : i32
    %c0_i32_0 = arith.constant 0 : i32
    %c0_i32_1 = arith.constant 0 : i32
    return %c0_i32, %c0_i32_0 : i32, i32
  }
  func.func @transform_6(%arg0: i32) -> (i32, i32) {
    %c0_i32 = arith.constant 0 : i32
    %c0_i32_0 = arith.constant 0 : i32
    return %arg0, %c0_i32 : i32, i32
  }
}

</mosaic_0001>

<llo_original>
// kernel: tpu_custom_call.1
$region0: #{tpu_custom_call.1}
  #allocation0 [shape = 'u32[]', space=smem, size = 0x4, offset = 0x4, fixed_abs, tag = 'smem constant byte address 0x4 - core index']
  #allocation1 [shape = 'u32[144,128]{1,0:T(1,128)}', space=vmem, size = 0x12000, scoped, tag = 'internal scratch']
  %s0 = inlined_call_operand.vmem [shape: f32[16,128], index: 0, kind: input, shape index: {}]
  %s1 = inlined_call_operand.vmem [shape: f32[128,32], index: 1, kind: input, shape index: {}]
  %s2 = inlined_call_operand.vmem [shape: f32[1,32], index: 2, kind: input, shape index: {}]
  %s3 = inlined_call_operand.vmem [shape: f32[16,32], index: 3, kind: input, shape index: {}]
  %s4 = inlined_call_operand.vmem [shape: f32[1,32], index: 4, kind: input, shape index: {}]
  %s5 = inlined_call_operand.vmem [shape: f32[1,32], index: 5, kind: input, shape index: {}]
  %s6 = inlined_call_operand.hbm [shape: f32[16,32], index: 6, kind: output, shape index: {}]
  %s7 = sld [smem:[#allocation0]]
  $region34: #{tpu_custom_call.1} parent=0
    _
  %s9 = ssub.s32 1, %s7
  %s10 = scalar_select 0, %s9, %s7
  $region1: #{tpu_custom_call.1} parent=0
    #allocation2 [shape = 'u8[8192]{0}', space=vmem, size = 0x2000, scoped, tag = 'output window, operand 0, single buffered']
    #allocation3 [shape = 's32[1]{0}', space=sflag, size = 0x4, scoped, tag = 'scoped memory for tpu_custom_call.1']
    %11 = vsyncpa [#allocation3], 0
    // Predicated region
    $region2: #{tpu_custom_call.1} parent=1 // pred_check
      _
    $region3: #{tpu_custom_call.1} parent=1 // pred_check_branch
      %13 = sbr.rel (0) target = $region5
    $region4: #{tpu_custom_call.1} parent=1 // pred_region
      _
    $region5: #{tpu_custom_call.1} parent=1 // pred_fallthru
      _
    // Predicated region
    $region6: #{tpu_custom_call.1} parent=1 // pred_check
      _
    $region7: #{tpu_custom_call.1} parent=1 // pred_check_branch
      %15 = sbr.rel (0) target = $region9
    $region8: #{tpu_custom_call.1} parent=1 // pred_region
      _
    $region9: #{tpu_custom_call.1} parent=1 // pred_fallthru
      _
    // Predicated region
    $region10: #{tpu_custom_call.1} parent=1 // pred_check
      _
    $region11: #{tpu_custom_call.1} parent=1 // pred_check_branch
      %17 = sbr.rel (0) target = $region13
    $region12: #{tpu_custom_call.1} parent=1 // pred_region
      _
    $region13: #{tpu_custom_call.1} parent=1 // pred_fallthru
      _
    // Predicated region
    $region14: #{tpu_custom_call.1} parent=1 // pred_check
      _
    $region15: #{tpu_custom_call.1} parent=1 // pred_check_branch
      %19 = sbr.rel (0) target = $region17
    $region16: #{tpu_custom_call.1} parent=1 // pred_region
      _
    $region17: #{tpu_custom_call.1} parent=1 // pred_fallthru
      _
    // Predicated region
    $region18: #{tpu_custom_call.1} parent=1 // pred_check
      _
    $region19: #{tpu_custom_call.1} parent=1 // pred_check_branch
      %21 = sbr.rel (0) target = $region21
    $region20: #{tpu_custom_call.1} parent=1 // pred_region
      _
    $region21: #{tpu_custom_call.1} parent=1 // pred_fallthru
      _
    // Predicated region
    $region22: #{tpu_custom_call.1} parent=1 // pred_check
      _
    $region23: #{tpu_custom_call.1} parent=1 // pred_check_branch
      %23 = sbr.rel (0) target = $region25
    $region24: #{tpu_custom_call.1} parent=1 // pred_region
      _
    $region25: #{tpu_custom_call.1} parent=1 // pred_fallthru
      _
    %v24 = vld [vmem:[%s0] sm:$0xff]
    %v25 = vld [vmem:[%s0 + $0x8] sm:$0xff]
    %v26 = vld [vmem:[%s1] sm:$0xff]
    %v27 = vld [vmem:[%s1 + $0x8] sm:$0xff]
    %v28 = vld [vmem:[%s1 + $0x10] sm:$0xff]
    %v29 = vld [vmem:[%s1 + $0x18] sm:$0xff]
    %v30 = vld [vmem:[%s1 + $0x20] sm:$0xff]
    %v31 = vld [vmem:[%s1 + $0x28] sm:$0xff]
    %v32 = vld [vmem:[%s1 + $0x30] sm:$0xff]
    %v33 = vld [vmem:[%s1 + $0x38] sm:$0xff]
    %v34 = vld [vmem:[%s1 + $0x40] sm:$0xff]
    %v35 = vld [vmem:[%s1 + $0x48] sm:$0xff]
    %v36 = vld [vmem:[%s1 + $0x50] sm:$0xff]
    %v37 = vld [vmem:[%s1 + $0x58] sm:$0xff]
    %v38 = vld [vmem:[%s1 + $0x60] sm:$0xff]
    %v39 = vld [vmem:[%s1 + $0x68] sm:$0xff]
    %v40 = vld [vmem:[%s1 + $0x70] sm:$0xff]
    %v41 = vld [vmem:[%s1 + $0x78] sm:$0xff]
    %v42 = vld [vmem:[%s3] sm:$0xff]
    %v43 = vld [vmem:[%s3 + $0x8] sm:$0xff]
    %v44 = vld [vmem:[%s2] sm:$0x1]
    %v46 = vlaneseq
    %v47 = vshrl.u32 %v46, 7
    %v48 = vsub.s32 0, %v47
    %v49 = vrot.slane %v44, %v48
    %v51 = vadd.f32 %v42, %v49
    %v52 = vadd.f32 %v43, %v49
    %53 = vmatprep.subr.mxu0 0.0
    %54 = vmatpush1.msra.mxu0 %v41
    %55 = vmatprep.subr.mxu0 0.0
    %56 = vmatpush1.msra.mxu0 %v40
    %57 = vmatprep.subr.mxu0 0.0
    %58 = vmatpush1.msra.mxu0 %v39
    %59 = vmatprep.subr.mxu0 0.0
    %60 = vmatpush1.msra.mxu0 %v38
    %61 = vmatprep.subr.mxu0 0.0
    %62 = vmatpush1.msra.mxu0 %v37
    %63 = vmatprep.subr.mxu0 0.0
    %64 = vmatpush1.msra.mxu0 %v36
    %65 = vmatprep.subr.mxu0 0.0
    %66 = vmatpush1.msra.mxu0 %v35
    %67 = vmatprep.subr.mxu0 0.0
    %68 = vmatpush1.msra.mxu0 %v34
    %69 = vmatprep.subr.mxu0 0.0
    %70 = vmatpush1.msra.mxu0 %v33
    %71 = vmatprep.subr.mxu0 0.0
    %72 = vmatpush1.msra.mxu0 %v32
    %73 = vmatprep.subr.mxu0 0.0
    %74 = vmatpush1.msra.mxu0 %v31
    %75 = vmatprep.subr.mxu0 0.0
    %76 = vmatpush1.msra.mxu0 %v30
    %77 = vmatprep.subr.mxu0 0.0
    %78 = vmatpush1.msra.mxu0 %v29
    %79 = vmatprep.subr.mxu0 0.0
    %80 = vmatpush1.msra.mxu0 %v28
    %81 = vmatprep.subr.mxu0 0.0
    %82 = vmatpush1.msra.mxu0 %v27
    %83 = vmatprep.subr.mxu0 0.0
    %84 = vmatpush1.msra.mxu0 %v26
    %85 = vmatprep.subr.mxu0 0.0
    %86 = vmatpush2.msra.mxu0 0.0
    %87 = vmatprep.subr.mxu0 0.0
    %88 = vmatpush2.msra.mxu0 0.0
    %89 = vmatprep.subr.mxu0 0.0
    %90 = vmatpush2.msra.mxu0 0.0
    %91 = vmatprep.subr.mxu0 0.0
    %92 = vmatpush2.msra.mxu0 0.0
    %93 = vmatprep.subr.mxu0 0.0
    %94 = vmatpush2.msra.mxu0 0.0
    %95 = vmatprep.subr.mxu0 0.0
    %96 = vmatpush2.msra.mxu0 0.0
    %97 = vmatprep.subr.mxu0 0.0
    %98 = vmatpush2.msra.mxu0 0.0
    %99 = vmatprep.subr.mxu0 0.0
    %100 = vmatpush2.msra.mxu0 0.0
    %101 = vmatprep.subr.mxu0 0.0
    %102 = vmatpush2.msra.mxu0 0.0
    %103 = vmatprep.subr.mxu0 0.0
    %104 = vmatpush2.msra.mxu0 0.0
    %105 = vmatprep.subr.mxu0 0.0
    %106 = vmatpush2.msra.mxu0 0.0
    %107 = vmatprep.subr.mxu0 0.0
    %108 = vmatpush2.msra.mxu0 0.0
    %109 = vmatprep.subr.mxu0 0.0
    %110 = vmatpush2.msra.mxu0 0.0
    %111 = vmatprep.subr.mxu0 0.0
    %112 = vmatpush2.msra.mxu0 0.0
    %113 = vmatprep.subr.mxu0 0.0
    %114 = vmatpush2.msra.mxu0 0.0
    %115 = vmatprep.subr.mxu0 0.0
    %116 = vmatpush2.msra.mxu0 0.0
    %117 = vmatprep.mubr.f32.mxu0 0.0
    %118 = vmatmul.mubr.f32.gmra.mxu0 %v24
    %v119 = vpop.f32.mrf.mxu0
    %v120 = vadd.f32 %v51, %v119
    %v121 = vpop.f32.mrf.mxu0
    %122 = vmatprep.mubr.f32.mxu0 0.0
    %123 = vmatmul.mubr.f32.gmra.mxu0 %v25
    %v124 = vpop.f32.mrf.mxu0
    %v125 = vadd.f32 %v52, %v124
    %v126 = vpop.f32.mrf.mxu0
    %127 = vdwg.mxu0
    %vm128 = vcmask 261120
    %v129 = vsel %vm128, %v120, 0.0
    %130 = vadd.xlane.f32.xlu0 %v129
    %v131 = vpop.xlane.xlu0 %130
    %v132 = vsel %vm128, %v125, 0.0
    %133 = vadd.xlane.f32.xlu0 %v132
    %v134 = vpop.xlane.xlu0 %133
    %v135 = vmul.f32 %v131, 0.03125
    %v136 = vmul.f32 %v134, 0.03125
    %v137 = vsub.f32 %v120, %v135
    %v138 = vsub.f32 %v125, %v136
    %v139 = vmul.f32 %v137, %v137
    %v140 = vmul.f32 %v138, %v138
    %v141 = vsel %vm128, %v139, 0.0
    %142 = vadd.xlane.f32.xlu0 %v141
    %v143 = vpop.xlane.xlu0 %142
    %v144 = vsel %vm128, %v140, 0.0
    %145 = vadd.xlane.f32.xlu0 %v144
    %v146 = vpop.xlane.xlu0 %145
    %v147 = vmul.f32 %v143, 0.03125
    %v148 = vmul.f32 %v146, 0.03125
    %v149 = vadd.f32 %v147, 1e-12
    %v150 = vadd.f32 %v148, 1e-12
    %v151 = vrsqrt.pop %v149
    %v152 = vrsqrt.pop %v150
    %v153 = vmul.f32 %v137, %v151
    %v154 = vmul.f32 %v138, %v152
    %v155 = vld [vmem:[%s4] sm:$0x1]
    %v157 = vlaneseq
    %v158 = vshrl.u32 %v157, 7
    %v159 = vsub.s32 0, %v158
    %v160 = vrot.slane %v155, %v159
    %v162 = vmul.f32 %v153, %v160
    %v163 = vmul.f32 %v154, %v160
    %v164 = vld [vmem:[%s5] sm:$0x1]
    %v166 = vlaneseq
    %v167 = vshrl.u32 %v166, 7
    %v168 = vsub.s32 0, %v167
    %v169 = vrot.slane %v164, %v168
    %v171 = vadd.f32 %v162, %v169
    %v172 = vadd.f32 %v163, %v169
    %173 = vst.msk [vmem:[#allocation2] sm:$0xff] %vm128, %v171
    %174 = vst.msk [vmem:[#allocation2 + $0x8] sm:$0xff] %vm128, %v172
    // Predicated region
    $region26: #{tpu_custom_call.1} parent=1 // pred_check
      _
    $region27: #{tpu_custom_call.1} parent=1 // pred_check_branch
      %176 = sbr.rel (0) target = $region29
    $region28: #{tpu_custom_call.1} parent=1 // pred_region
      %s178 = ssub.s32 256, 256
      %179 = vsyncadd [#allocation3], %s178
      %s180 = sshll.u32 [#allocation2], 4
      %s181 = int_to_ptr.vmem [resolvable:$true] %s180
      %186 = dma.vmem_to_hbm [thread:$0]  %s181, 256, %s6, [#allocation3], 128, 128, 8
    $region29: #{tpu_custom_call.1} parent=1 // pred_fallthru
      _
    // Predicated region
    $region30: #{tpu_custom_call.1} parent=1 // pred_check
      _
    $region31: #{tpu_custom_call.1} parent=1 // pred_check_branch
      %188 = sbr.rel (0) target = $region33
    $region32: #{tpu_custom_call.1} parent=1 // pred_region
      %189 = dma.done [#allocation3], 256
    $region33: #{tpu_custom_call.1} parent=1 // pred_fallthru
      _
    %190 = vsyncpa [#allocation3], 1

</llo_original>
